<compile_context>
chip_gen: v7x
topology: tpu7x:2x2x1
jax: 0.10.0
libtpu: 0.0.40
codegen_flags: <defaults>
</compile_context>

<pallas_src>
import jax
import jax.numpy as jnp
from jax.experimental import pallas as pl
from jax.experimental.pallas import tpu as pltpu


def _round_up(x, m):
    return (x + m - 1) // m * m


_VMEM_TILE_BUDGET = 16 * 1024 * 1024  # bytes for double-buffered in/out tiles


def _choose_block_m(m_rows, d_eff, n_eff, itemsize):
    # Lane-padded VMEM bytes per kernel row (input tile + output tile), x2
    # for the pipeline's double buffers.
    per_row = 2 * (_round_up(d_eff, 128) + _round_up(n_eff, 128)) * itemsize
    cap = _VMEM_TILE_BUDGET // per_row
    cap = min(cap, 8192)                 # target 2048-8192 rows per step
    cap = max(256, cap // 256 * 256)
    if m_rows <= cap:
        # Small/medium problem: one grid step covering all rows (block equals
        # the full array extent, so any row count is a legal block shape).
        return m_rows
    # Large problem: big blocks, but keep the grid >= ~8 steps so each
    # TensorCore (after "parallel" sharding on v7x) still has several
    # iterations to hide DMA behind compute.
    return min(cap, max(256, _round_up(pl.cdiv(m_rows, 8), 256)))


def cas_kernel(x_ref, w_ref, o_ref):
    # x_ref: (block_m, D_eff)   w_ref: (D_eff, N_eff)   o_ref: (block_m, N_eff)
    o_ref[...] = jnp.dot(
        x_ref[...], w_ref[...], preferred_element_type=jnp.float32
    ).astype(o_ref.dtype)


def cas_module_forward(content, conv_weight):
    """content: (B, T, d_model); conv_weight: (num_class+1, d_model)
    -> (B, T, num_class+1)."""
    B, T, D = content.shape
    N, Dw = conv_weight.shape
    assert Dw == D

    M = B * T
    dtype = content.dtype
    itemsize = jnp.dtype(dtype).itemsize

    # Host-side layout plumbing: x @ W layout for the kernel.
    w = conv_weight.T.astype(dtype)  # (D, N)

    # Lane-dense fold: pack `fold` rows into the lane dimension using a
    # block-diagonal weight. Only used when it needs no padding (M % fold == 0).
    fold = 128 // D if (D < 128 and 128 % D == 0) else 1
    while fold > 1 and M % fold:
        fold //= 2

    d_eff, n_eff, m_rows = fold * D, fold * N, M // fold
    x = content.reshape(m_rows, d_eff)                 # contiguous -> free view
    if fold > 1:
        w = jnp.kron(jnp.eye(fold, dtype=dtype), w)    # (fold*D, fold*N)

    block_m = _choose_block_m(m_rows, d_eff, n_eff, itemsize)
    grid = (pl.cdiv(m_rows, block_m),)

    cost = pl.CostEstimate(
        flops=2 * m_rows * d_eff * n_eff,
        transcendentals=0,
        bytes_accessed=itemsize * (m_rows * d_eff + d_eff * n_eff
                                   + m_rows * n_eff),
    )

    out = pl.pallas_call(
        cas_kernel,
        out_shape=jax.ShapeDtypeStruct((m_rows, n_eff), dtype),
        grid=grid,
        in_specs=[
            pl.BlockSpec((block_m, d_eff), lambda i: (i, 0)),
            pl.BlockSpec((d_eff, n_eff), lambda i: (0, 0)),
        ],
        out_specs=pl.BlockSpec((block_m, n_eff), lambda i: (i, 0)),
        compiler_params=pltpu.CompilerParams(
            dimension_semantics=("parallel",),
            vmem_limit_bytes=40 * 1024 * 1024,
        ),
        cost_estimate=cost,
    )(x, w)

    # (m_rows, fold*N) -> (B, T, N) is a contiguous reshape (free view).
    return out.reshape(B, T, N)


# ---------------- pure-JAX reference (correctness check) ----------------
def reference(content, conv_weight):
    # Conv1d with kernel_size=1, no bias == per-timestep matmul with W^T.
    return jnp.einsum("btd,nd->btn", content, conv_weight)


if __name__ == "__main__":
    B, T = 2, 16
    d_model, num_class = 32, 28
    N = num_class + 1

    key = jax.random.PRNGKey(0)
    kx, kw = jax.random.split(key)
    content = jax.random.normal(kx, (B, T, d_model), jnp.float32)
    # PyTorch Conv1d weight (out_ch, in_ch, 1) squeezed to (out_ch, in_ch).
    bound = 1.0 / (d_model ** 0.5)
    conv_weight = jax.random.uniform(kw, (N, d_model), jnp.float32, -bound, bound)

    out = cas_module_forward(content, conv_weight)
    out = jax.block_until_ready(out)

    ref = reference(content, conv_weight)
    assert out.shape == (B, T, N)
    assert jnp.allclose(out, ref, atol=1e-4, rtol=1e-4), (
        float(jnp.max(jnp.abs(out - ref))))

    # TODO(synk): self.dropout (nn.Dropout(0.2)) is declared in CAS_Module but
    # never applied in forward(), so it is omitted here (matches PyTorch).
    print("KERNEL_OK")
</pallas_src>

<mosaic_0001>
module attributes {stable_mosaic.version = 11 : i64} {
  func.func @cas_kernel(%arg0: i32, %arg1: memref<8x128xf32, #tpu.memory_space<vmem>>, %arg2: memref<128x116xf32, #tpu.memory_space<vmem>>, %arg3: memref<8x116xf32, #tpu.memory_space<vmem>>) attributes {dimension_semantics = [#tpu.dimension_semantics<parallel>], iteration_bounds = array<i64: 1>, scalar_prefetch = 0 : i64, scratch_operands = 0 : i64, tpu.core_type = #tpu.core_type<tc>, window_params = [{transform_indices = @transform_0, window_bounds = array<i64: 8, 128>}, {pipeline_mode = #tpu.pipeline_mode<synchronous>, transform_indices = @transform_1, window_bounds = array<i64: 128, 116>}, {transform_indices = @transform_2, window_bounds = array<i64: 8, 116>}]} {
    %c0 = arith.constant 0 : index
    %c0_0 = arith.constant 0 : index
    %0 = vector.load %arg1[%c0, %c0_0] : memref<8x128xf32, #tpu.memory_space<vmem>>, vector<8x128xf32>
    %c0_1 = arith.constant 0 : index
    %c0_2 = arith.constant 0 : index
    %1 = vector.load %arg2[%c0_1, %c0_2] : memref<128x116xf32, #tpu.memory_space<vmem>>, vector<128x116xf32>
    %cst = arith.constant dense<0.000000e+00> : vector<8x116xf32>
    %2 = tpu.matmul %0, %1, %cst {dimension_numbers = #tpu.dot_dimension_numbers<[1], [0], [0], [1], [0, 0, 1, 1], [], []>} : vector<8x128xf32>, vector<128x116xf32>, vector<8x116xf32> -> vector<8x116xf32>
    %c0_3 = arith.constant 0 : index
    %c0_4 = arith.constant 0 : index
    %3 = vector.load %arg3[%c0_3, %c0_4] : memref<8x116xf32, #tpu.memory_space<vmem>>, vector<8x116xf32>
    tpu.vector_store %arg3[%c0_3, %c0_4], %2 {strides = array<i32>} : memref<8x116xf32, #tpu.memory_space<vmem>>, vector<8x116xf32>,
    return
  }
  func.func @transform_0(%arg0: i32) -> (i32, i32) {
    %c0_i32 = arith.constant 0 : i32
    %c0_i32_0 = arith.constant 0 : i32
    return %arg0, %c0_i32 : i32, i32
  }
  func.func @transform_1(%arg0: i32) -> (i32, i32) {
    %c0_i32 = arith.constant 0 : i32
    %c0_i32_0 = arith.constant 0 : i32
    %c0_i32_1 = arith.constant 0 : i32
    return %c0_i32, %c0_i32_0 : i32, i32
  }
  func.func @transform_2(%arg0: i32) -> (i32, i32) {
    %c0_i32 = arith.constant 0 : i32
    %c0_i32_0 = arith.constant 0 : i32
    return %arg0, %c0_i32 : i32, i32
  }
}

</mosaic_0001>

<llo_original>
// kernel: tpu_custom_call.1
$region0: #{tpu_custom_call.1}
  #allocation0 [shape = 'u32[]', space=smem, size = 0x4, offset = 0x4, fixed_abs, tag = 'smem constant byte address 0x4 - core index']
  #allocation1 [shape = 'u32[144,128]{1,0:T(1,128)}', space=vmem, size = 0x12000, scoped, tag = 'internal scratch']
  %s0 = inlined_call_operand.vmem [shape: f32[8,128], index: 0, kind: input, shape index: {}]
  %s1 = inlined_call_operand.vmem [shape: f32[128,116], index: 1, kind: input, shape index: {}]
  %s2 = inlined_call_operand.hbm [shape: f32[8,116], index: 2, kind: output, shape index: {}]
  %s3 = sld [smem:[#allocation0]]
  $region18: #{tpu_custom_call.1} parent=0
    _
  %s5 = ssub.s32 1, %s3
  %s6 = scalar_select 0, %s5, %s3
  $region1: #{tpu_custom_call.1} parent=0
    #allocation2 [shape = 'u8[4096]{0}', space=vmem, size = 0x1000, scoped, tag = 'output window, operand 0, single buffered']
    #allocation3 [shape = 's32[1]{0}', space=sflag, size = 0x4, scoped, tag = 'scoped memory for tpu_custom_call.1']
    %7 = vsyncpa [#allocation3], 0
    // Predicated region
    $region2: #{tpu_custom_call.1} parent=1 // pred_check
      _
    $region3: #{tpu_custom_call.1} parent=1 // pred_check_branch
      %9 = sbr.rel (0) target = $region5
    $region4: #{tpu_custom_call.1} parent=1 // pred_region
      _
    $region5: #{tpu_custom_call.1} parent=1 // pred_fallthru
      _
    // Predicated region
    $region6: #{tpu_custom_call.1} parent=1 // pred_check
      _
    $region7: #{tpu_custom_call.1} parent=1 // pred_check_branch
      %11 = sbr.rel (0) target = $region9
    $region8: #{tpu_custom_call.1} parent=1 // pred_region
      _
    $region9: #{tpu_custom_call.1} parent=1 // pred_fallthru
      _
    %v12 = vld [vmem:[%s0] sm:$0xff]
    %v13 = vld [vmem:[%s1] sm:$0xff]
    %v14 = vld [vmem:[%s1 + $0x8] sm:$0xff]
    %v15 = vld [vmem:[%s1 + $0x10] sm:$0xff]
    %v16 = vld [vmem:[%s1 + $0x18] sm:$0xff]
    %v17 = vld [vmem:[%s1 + $0x20] sm:$0xff]
    %v18 = vld [vmem:[%s1 + $0x28] sm:$0xff]
    %v19 = vld [vmem:[%s1 + $0x30] sm:$0xff]
    %v20 = vld [vmem:[%s1 + $0x38] sm:$0xff]
    %v21 = vld [vmem:[%s1 + $0x40] sm:$0xff]
    %v22 = vld [vmem:[%s1 + $0x48] sm:$0xff]
    %v23 = vld [vmem:[%s1 + $0x50] sm:$0xff]
    %v24 = vld [vmem:[%s1 + $0x58] sm:$0xff]
    %v25 = vld [vmem:[%s1 + $0x60] sm:$0xff]
    %v26 = vld [vmem:[%s1 + $0x68] sm:$0xff]
    %v27 = vld [vmem:[%s1 + $0x70] sm:$0xff]
    %v28 = vld [vmem:[%s1 + $0x78] sm:$0xff]
    %29 = vmatprep.subr.mxu0 0.0
    %30 = vmatpush1.msra.mxu0 %v13
    %31 = vmatprep.subr.mxu0 0.0
    %32 = vmatpush1.msra.mxu0 %v14
    %33 = vmatprep.subr.mxu0 0.0
    %34 = vmatpush1.msra.mxu0 %v15
    %35 = vmatprep.subr.mxu0 0.0
    %36 = vmatpush1.msra.mxu0 %v16
    %37 = vmatprep.subr.mxu0 0.0
    %38 = vmatpush1.msra.mxu0 %v17
    %39 = vmatprep.subr.mxu0 0.0
    %40 = vmatpush1.msra.mxu0 %v18
    %41 = vmatprep.subr.mxu0 0.0
    %42 = vmatpush1.msra.mxu0 %v19
    %43 = vmatprep.subr.mxu0 0.0
    %44 = vmatpush1.msra.mxu0 %v20
    %45 = vmatprep.subr.mxu0 0.0
    %46 = vmatpush1.msra.mxu0 %v21
    %47 = vmatprep.subr.mxu0 0.0
    %48 = vmatpush1.msra.mxu0 %v22
    %49 = vmatprep.subr.mxu0 0.0
    %50 = vmatpush1.msra.mxu0 %v23
    %51 = vmatprep.subr.mxu0 0.0
    %52 = vmatpush1.msra.mxu0 %v24
    %53 = vmatprep.subr.mxu0 0.0
    %54 = vmatpush1.msra.mxu0 %v25
    %55 = vmatprep.subr.mxu0 0.0
    %56 = vmatpush1.msra.mxu0 %v26
    %57 = vmatprep.subr.mxu0 0.0
    %58 = vmatpush1.msra.mxu0 %v27
    %59 = vmatprep.subr.mxu0 0.0
    %60 = vmatpush1.msra.mxu0 %v28
    %61 = vmatprep.subr.mxu0 0.0
    %62 = vmatpush1.msra.mxu0 0.0
    %63 = vmatprep.subr.mxu0 0.0
    %64 = vmatpush1.msra.mxu0 0.0
    %65 = vmatprep.subr.mxu0 0.0
    %66 = vmatpush1.msra.mxu0 0.0
    %67 = vmatprep.subr.mxu0 0.0
    %68 = vmatpush1.msra.mxu0 0.0
    %69 = vmatprep.subr.mxu0 0.0
    %70 = vmatpush1.msra.mxu0 0.0
    %71 = vmatprep.subr.mxu0 0.0
    %72 = vmatpush1.msra.mxu0 0.0
    %73 = vmatprep.subr.mxu0 0.0
    %74 = vmatpush1.msra.mxu0 0.0
    %75 = vmatprep.subr.mxu0 0.0
    %76 = vmatpush1.msra.mxu0 0.0
    %77 = vmatprep.subr.mxu0 0.0
    %78 = vmatpush1.msra.mxu0 0.0
    %79 = vmatprep.subr.mxu0 0.0
    %80 = vmatpush1.msra.mxu0 0.0
    %81 = vmatprep.subr.mxu0 0.0
    %82 = vmatpush1.msra.mxu0 0.0
    %83 = vmatprep.subr.mxu0 0.0
    %84 = vmatpush1.msra.mxu0 0.0
    %85 = vmatprep.subr.mxu0 0.0
    %86 = vmatpush1.msra.mxu0 0.0
    %87 = vmatprep.subr.mxu0 0.0
    %88 = vmatpush1.msra.mxu0 0.0
    %89 = vmatprep.subr.mxu0 0.0
    %90 = vmatpush1.msra.mxu0 0.0
    %91 = vmatprep.subr.mxu0 0.0
    %92 = vmatpush1.msra.mxu0 0.0
    %93 = vmatprep.mubr.f32.mxu0 0.0
    %94 = vmatmul.mubr.f32.gmra.mrb[0].mxu0 %v12
    %v95 = vpop.f32.mrb[0].mxu0
    %v96 = vadd.f32 0.0, %v95
    %v97 = vpop.f32.mrb[0].mxu0
    %98 = vdwg.mxu0
    %vm99 = vcmask 949248
    %100 = vst.msk [vmem:[#allocation2] sm:$0xff] %vm99, %v96
    // Predicated region
    $region10: #{tpu_custom_call.1} parent=1 // pred_check
      _
    $region11: #{tpu_custom_call.1} parent=1 // pred_check_branch
      %102 = sbr.rel (0) target = $region13
    $region12: #{tpu_custom_call.1} parent=1 // pred_region
      %s104 = ssub.s32 128, 128
      %105 = vsyncadd [#allocation3], %s104
      %s107 = sshll.u32 [#allocation2], 4
      %s108 = int_to_ptr.vmem [resolvable:$true] %s107
      %110 = dma.vmem_to_hbm [thread:$0]  %s108, 128, %s2, [#allocation3]
    $region13: #{tpu_custom_call.1} parent=1 // pred_fallthru
      _
    // Predicated region
    $region14: #{tpu_custom_call.1} parent=1 // pred_check
      _
    $region15: #{tpu_custom_call.1} parent=1 // pred_check_branch
      %112 = sbr.rel (0) target = $region17
    $region16: #{tpu_custom_call.1} parent=1 // pred_region
      %113 = dma.done [#allocation3], 128
    $region17: #{tpu_custom_call.1} parent=1 // pred_fallthru
      _
    %114 = vsyncpa [#allocation3], 1

</llo_original>
